<compile_context>
chip_gen: v7x
topology: tpu7x:2x2x1
jax: 0.10.0
libtpu: 0.0.40
codegen_flags: <defaults>
</compile_context>

<pallas_src>
from functools import partial

import jax
import jax.numpy as jnp
from jax.experimental import pallas as pl
from jax.experimental.pallas import tpu as pltpu


_BATCH_TILE = 512        # batch rows per grid step when B is large
_GRIDLESS_MAX_B = 1024   # at/below this, one grid-less fused call is cheapest


def _fused_mlp_kernel(x_ref, *refs, num_layers):
    """Whole MLP_Decoder net (Linear->Tanh ... ->Linear->ReLU) in one body.

    refs = (w0, b0, w1, b1, ..., w_{L-1}, b_{L-1}, o_ref).  All operands are
    VMEM tiles delivered by BlockSpec DMAs (issued up-front, in parallel),
    so there is no manual DMA machinery in the body.
    """
    o_ref = refs[-1]
    wb = refs[:-1]

    h = x_ref[...].astype(jnp.float32)
    for i in range(num_layers):
        w = wb[2 * i][...]
        b = wb[2 * i + 1][...]
        # bf16 cast only at the MXU boundary; accumulate in f32.
        h = jnp.dot(h.astype(w.dtype), w, preferred_element_type=jnp.float32)
        h = h + b.astype(jnp.float32)
        # Torch module: Tanh after every hidden Linear, ReLU after the LAST one.
        # Keep activations in f32 on the VPU (v5e has no bf16 VPU/EUP path).
        h = jnp.tanh(h) if i < num_layers - 1 else jnp.maximum(h, 0.0)
    o_ref[...] = h.astype(o_ref.dtype)


def init_mlp_decoder_params(key, hidden_sizes, weight_dtype=jnp.bfloat16):
    """nn.Linear-style init; weights stored transposed as (in, out) in bf16."""
    params = []
    for i in range(len(hidden_sizes) - 1):
        fan_in, fan_out = hidden_sizes[i], hidden_sizes[i + 1]
        key, kw, kb = jax.random.split(key, 3)
        bound = 1.0 / float(fan_in) ** 0.5
        w = jax.random.uniform(kw, (fan_in, fan_out), jnp.float32, -bound, bound)
        b = jax.random.uniform(kb, (1, fan_out), jnp.float32, -bound, bound)
        params.append((w.astype(weight_dtype), b))   # bias stays f32
    return params


def _cost_estimate(rows, params, x_dtype, out_dtype):
    """Advisory estimate so XLA schedules neighbors around the fused call."""
    flops = 0
    transcendentals = 0
    bytes_accessed = rows * params[0][0].shape[0] * jnp.dtype(x_dtype).itemsize
    bytes_accessed += rows * params[-1][0].shape[1] * jnp.dtype(out_dtype).itemsize
    for i, (w, b) in enumerate(params):
        flops += 2 * rows * w.shape[0] * w.shape[1]
        if i < len(params) - 1:
            transcendentals += rows * w.shape[1]          # tanh
        bytes_accessed += w.size * w.dtype.itemsize + b.size * b.dtype.itemsize
    return pl.CostEstimate(flops=flops, transcendentals=transcendentals,
                           bytes_accessed=bytes_accessed)


def mlp_decoder_forward(xs, params, outputs_dims, out_dtype=jnp.float32):
    """Mirrors MLP_Decoder.forward: xs = (input, x) -> (f, [f]).

    NOTE: if this decoder is invoked many times per step, batch the calls into
    one larger-B invocation (or keep weights resident via cross-call prefetch)
    — the per-call floor here is weight fetch + launch overhead, not compute.
    """
    _inp, x = xs                      # `input` is unused by the net (as in torch)
    B, d_in = x.shape
    num_layers = len(params)
    d_out = params[-1][0].shape[1]
    wb_flat = [a for wb in params for a in wb]
    kernel = partial(_fused_mlp_kernel, num_layers=num_layers)
    vmem_spec = pl.BlockSpec(memory_space=pltpu.MemorySpace.VMEM)

    if B <= _GRIDLESS_MAX_B:
        # Small batch: one grid-less call; every operand is a whole-array VMEM
        # tile (all input DMAs issued in parallel before the body runs).
        out = pl.pallas_call(
            kernel,
            out_shape=jax.ShapeDtypeStruct((B, d_out), out_dtype),
            in_specs=[vmem_spec] * (1 + 2 * num_layers),
            out_specs=vmem_spec,
            cost_estimate=_cost_estimate(B, params, x.dtype, out_dtype),
        )(x, *wb_flat)
    else:
        # Large batch: tile the batch axis so activations/output never blow
        # VMEM (sized for v7x's 64 MiB) and mark it "parallel" so v7x's two
        # TensorCores split the work.  Weights load once (index_map -> (0,0)).
        tb = _BATCH_TILE
        b_pad = pl.cdiv(B, tb) * tb
        x_p = x if b_pad == B else jnp.pad(x, ((0, b_pad - B), (0, 0)))
        in_specs = [pl.BlockSpec((tb, d_in), lambda i: (i, 0))]
        for w, b in params:
            in_specs += [pl.BlockSpec(w.shape, lambda i: (0, 0)),
                         pl.BlockSpec(b.shape, lambda i: (0, 0))]
        out = pl.pallas_call(
            kernel,
            out_shape=jax.ShapeDtypeStruct((b_pad, d_out), out_dtype),
            grid=(b_pad // tb,),
            in_specs=in_specs,
            out_specs=pl.BlockSpec((tb, d_out), lambda i: (i, 0)),
            compiler_params=pltpu.CompilerParams(
                dimension_semantics=("parallel",),
                vmem_limit_bytes=64 << 20),
            cost_estimate=_cost_estimate(b_pad, params, x.dtype, out_dtype),
        )(x_p, *wb_flat)
        out = out[:B]

    f = out.reshape(B, *outputs_dims)                  # .view(x.size(0), *outputs_dims)
    return f, [f]


def mlp_decoder_reference(xs, params, outputs_dims):
    """Pure-JAX reference following the same bf16-weight / f32-accum recipe."""
    _inp, x = xs
    h = x.astype(jnp.float32)
    n = len(params)
    for i, (w, b) in enumerate(params):
        h = jnp.dot(h.astype(w.dtype), w, preferred_element_type=jnp.float32) + b
        h = jnp.tanh(h) if i < n - 1 else jnp.maximum(h, 0.0)
    f = h.reshape(x.shape[0], *outputs_dims)
    return f, [f]


if __name__ == "__main__":
    key = jax.random.PRNGKey(0)
    k_inp, kx, kp, kx2 = jax.random.split(key, 4)

    # Decoder: small latent -> image-shaped output. prod(outputs_dims) == hidden_sizes[-1].
    hidden_sizes = (32, 256, 256, 1024)
    outputs_dims = (4, 16, 16)
    B = 2

    inp = jax.random.normal(k_inp, (B, 4, 16, 16), dtype=jnp.float32)   # ignored by the net
    x = jax.random.normal(kx, (B, hidden_sizes[0]), dtype=jnp.float32)
    params = init_mlp_decoder_params(kp, hidden_sizes)

    # --- small-batch (grid-less) path, matching the torch module's usage ---
    f, f_list = mlp_decoder_forward((inp, x), params, outputs_dims)
    f = jax.block_until_ready(f)

    f_ref, _ = mlp_decoder_reference((inp, x), params, outputs_dims)
    assert f.shape == (B, *outputs_dims), f.shape
    assert f_list[0] is f
    assert jnp.all(f >= 0.0), "final ReLU violated"
    assert jnp.allclose(f, f_ref, atol=1e-2, rtol=1e-2), \
        float(jnp.max(jnp.abs(f - f_ref)))

    # --- large-batch (batch-tiled grid) path, including the padding branch ---
    B2 = 1100                                             # not a multiple of the tile
    x2 = jax.random.normal(kx2, (B2, hidden_sizes[0]), dtype=jnp.float32)
    inp2 = jnp.zeros((B2, 4, 16, 16), dtype=jnp.float32)  # ignored by the net
    f2, _ = mlp_decoder_forward((inp2, x2), params, outputs_dims)
    f2 = jax.block_until_ready(f2)
    f2_ref, _ = mlp_decoder_reference((inp2, x2), params, outputs_dims)
    assert f2.shape == (B2, *outputs_dims), f2.shape
    assert jnp.all(f2 >= 0.0), "final ReLU violated (batched path)"
    assert jnp.allclose(f2, f2_ref, atol=1e-2, rtol=1e-2), \
        float(jnp.max(jnp.abs(f2 - f2_ref)))

    print("KERNEL_OK")
</pallas_src>

<mosaic_0001>
module attributes {stable_mosaic.version = 11 : i64} {
  func.func @_fused_mlp_kernel(%arg0: memref<2x32xf32, #tpu.memory_space<vmem>>, %arg1: memref<32x256xbf16, #tpu.memory_space<vmem>>, %arg2: memref<1x256xf32, #tpu.memory_space<vmem>>, %arg3: memref<256x256xbf16, #tpu.memory_space<vmem>>, %arg4: memref<1x256xf32, #tpu.memory_space<vmem>>, %arg5: memref<256x1024xbf16, #tpu.memory_space<vmem>>, %arg6: memref<1x1024xf32, #tpu.memory_space<vmem>>, %arg7: memref<2x1024xf32, #tpu.memory_space<vmem>>) attributes {dimension_semantics = [], scalar_prefetch = 0 : i64, scratch_operands = 0 : i64, tpu.core_type = #tpu.core_type<tc>} {
    %c0 = arith.constant 0 : index
    %c0_0 = arith.constant 0 : index
    %0 = vector.load %arg0[%c0, %c0_0] : memref<2x32xf32, #tpu.memory_space<vmem>>, vector<2x32xf32>
    %c0_1 = arith.constant 0 : index
    %c0_2 = arith.constant 0 : index
    %1 = vector.load %arg1[%c0_1, %c0_2] : memref<32x256xbf16, #tpu.memory_space<vmem>>, vector<32x256xbf16>
    %c0_3 = arith.constant 0 : index
    %c0_4 = arith.constant 0 : index
    %2 = vector.load %arg2[%c0_3, %c0_4] : memref<1x256xf32, #tpu.memory_space<vmem>>, vector<1x256xf32>
    %3 = arith.truncf %0 : vector<2x32xf32> to vector<2x32xbf16>
    %cst = arith.constant dense<0.000000e+00> : vector<2x256xf32>
    %4 = tpu.matmul %3, %1, %cst {dimension_numbers = #tpu.dot_dimension_numbers<[1], [0], [0], [1], [0, 0, 1, 1], [], []>} : vector<2x32xbf16>, vector<32x256xbf16>, vector<2x256xf32> -> vector<2x256xf32>
    %5 = vector.broadcast %2 : vector<1x256xf32> to vector<2x256xf32>
    %6 = arith.addf %4, %5 : vector<2x256xf32>
    %7 = math.tanh %6 : vector<2x256xf32>
    %c0_5 = arith.constant 0 : index
    %c0_6 = arith.constant 0 : index
    %8 = vector.load %arg3[%c0_5, %c0_6] : memref<256x256xbf16, #tpu.memory_space<vmem>>, vector<256x256xbf16>
    %c0_7 = arith.constant 0 : index
    %c0_8 = arith.constant 0 : index
    %9 = vector.load %arg4[%c0_7, %c0_8] : memref<1x256xf32, #tpu.memory_space<vmem>>, vector<1x256xf32>
    %10 = arith.truncf %7 : vector<2x256xf32> to vector<2x256xbf16>
    %cst_9 = arith.constant dense<0.000000e+00> : vector<2x256xf32>
    %11 = tpu.matmul %10, %8, %cst_9 {dimension_numbers = #tpu.dot_dimension_numbers<[1], [0], [0], [1], [0, 0, 1, 1], [], []>} : vector<2x256xbf16>, vector<256x256xbf16>, vector<2x256xf32> -> vector<2x256xf32>
    %12 = vector.broadcast %9 : vector<1x256xf32> to vector<2x256xf32>
    %13 = arith.addf %11, %12 : vector<2x256xf32>
    %14 = math.tanh %13 : vector<2x256xf32>
    %c0_10 = arith.constant 0 : index
    %c0_11 = arith.constant 0 : index
    %15 = vector.load %arg5[%c0_10, %c0_11] : memref<256x1024xbf16, #tpu.memory_space<vmem>>, vector<256x1024xbf16>
    %c0_12 = arith.constant 0 : index
    %c0_13 = arith.constant 0 : index
    %16 = vector.load %arg6[%c0_12, %c0_13] : memref<1x1024xf32, #tpu.memory_space<vmem>>, vector<1x1024xf32>
    %17 = arith.truncf %14 : vector<2x256xf32> to vector<2x256xbf16>
    %cst_14 = arith.constant dense<0.000000e+00> : vector<2x1024xf32>
    %18 = tpu.matmul %17, %15, %cst_14 {dimension_numbers = #tpu.dot_dimension_numbers<[1], [0], [0], [1], [0, 0, 1, 1], [], []>} : vector<2x256xbf16>, vector<256x1024xbf16>, vector<2x1024xf32> -> vector<2x1024xf32>
    %19 = vector.broadcast %16 : vector<1x1024xf32> to vector<2x1024xf32>
    %20 = arith.addf %18, %19 : vector<2x1024xf32>
    %cst_15 = arith.constant 0.000000e+00 : f32
    %21 = vector.broadcast %cst_15 : f32 to vector<2x1024xf32>
    %22 = arith.maximumf %20, %21 : vector<2x1024xf32>
    %c0_16 = arith.constant 0 : index
    %c0_17 = arith.constant 0 : index
    %23 = vector.load %arg7[%c0_16, %c0_17] : memref<2x1024xf32, #tpu.memory_space<vmem>>, vector<2x1024xf32>
    tpu.vector_store %arg7[%c0_16, %c0_17], %22 {strides = array<i32>} : memref<2x1024xf32, #tpu.memory_space<vmem>>, vector<2x1024xf32>,
    return
  }
}

</mosaic_0001>

<llo_original>
// kernel: tpu_custom_call.1
$region0: #{tpu_custom_call.1}
  #allocation0 [shape = 'u32[]', space=smem, size = 0x4, offset = 0x4, fixed_abs, tag = 'smem constant byte address 0x4 - core index']
  #allocation1 [shape = 'u32[144,128]{1,0:T(1,128)}', space=vmem, size = 0x12000, scoped, tag = 'internal scratch']
  %s0 = inlined_call_operand.hbm [shape: f32[2,32], index: 0, kind: input, shape index: {}]
  %s1 = inlined_call_operand.hbm [shape: bf16[32,256], index: 1, kind: input, shape index: {}]
  %s2 = inlined_call_operand.vmem [shape: f32[1,256], index: 2, kind: input, shape index: {}]
  %s3 = inlined_call_operand.hbm [shape: bf16[256,256], index: 3, kind: input, shape index: {}]
  %s4 = inlined_call_operand.vmem [shape: f32[1,256], index: 4, kind: input, shape index: {}]
  %s5 = inlined_call_operand.hbm [shape: bf16[256,1024], index: 5, kind: input, shape index: {}]
  %s6 = inlined_call_operand.vmem [shape: f32[1,1024], index: 6, kind: input, shape index: {}]
  %s7 = inlined_call_operand.hbm [shape: f32[2,1024], index: 7, kind: output, shape index: {}]
  %s8 = sld [smem:[#allocation0]]
  $region54: #{tpu_custom_call.1} parent=0
    _
  %s10 = ssub.s32 1, %s8
  %s11 = scalar_select 0, %s10, %s8
  $region1: #{tpu_custom_call.1} parent=0
    #allocation2 [shape = 'u8[1024]{0}', space=vmem, size = 0x400, scoped, tag = 'input window, operand 0, single buffered']
    #allocation3 [shape = 's32[1]{0}', space=sflag, size = 0x4, scoped, tag = 'scoped memory for tpu_custom_call.1']
    #allocation4 [shape = 's32[1]{0}', space=sflag, size = 0x4, scoped, tag = 'scoped memory for tpu_custom_call.1']
    #allocation5 [shape = 'u8[16384]{0}', space=vmem, size = 0x4000, scoped, tag = 'input window, operand 1, single buffered']
    #allocation6 [shape = 's32[1]{0}', space=sflag, size = 0x4, scoped, tag = 'scoped memory for tpu_custom_call.1']
    #allocation7 [shape = 'u8[131072]{0}', space=vmem, size = 0x20000, scoped, tag = 'input window, operand 3, single buffered']
    #allocation8 [shape = 'u8[524288]{0}', space=vmem, size = 0x80000, scoped, tag = 'input window, operand 5, single buffered']
    #allocation9 [shape = 's32[1]{0}', space=sflag, size = 0x4, scoped, tag = 'scoped memory for tpu_custom_call.1']
    #allocation10 [shape = 'u8[8192]{0}', space=vmem, size = 0x2000, scoped, tag = 'output window, operand 0, single buffered']
    %12 = vsyncpa [#allocation3], 0
    %13 = vsyncpa [#allocation6], 0
    %14 = vsyncpa [#allocation9], 0
    %15 = vsyncpa [#allocation4], 0
    // Predicated region
    $region2: #{tpu_custom_call.1} parent=1 // pred_check
      _
    $region3: #{tpu_custom_call.1} parent=1 // pred_check_branch
      %17 = sbr.rel (0) target = $region5
    $region4: #{tpu_custom_call.1} parent=1 // pred_region
      %s19 = ssub.s32 32, 32
      %20 = vsyncadd [#allocation3], %s19
      %s22 = sshll.u32 [#allocation2], 4
      %s23 = int_to_ptr.vmem [resolvable:$true] %s22
      %25 = dma.hbm_to_vmem [thread:$0]  %s0, 32, %s23, [#allocation3]
    $region5: #{tpu_custom_call.1} parent=1 // pred_fallthru
      _
    // Predicated region
    $region6: #{tpu_custom_call.1} parent=1 // pred_check
      _
    $region7: #{tpu_custom_call.1} parent=1 // pred_check_branch
      %27 = sbr.rel (0) target = $region9
    $region8: #{tpu_custom_call.1} parent=1 // pred_region
      %s29 = ssub.s32 512, 512
      %30 = vsyncadd [#allocation6], %s29
      %s31 = sshll.u32 [#allocation5], 4
      %s32 = int_to_ptr.vmem [resolvable:$true] %s31
      %37 = dma.hbm_to_vmem [thread:$0]  %s1, 512, %s32, [#allocation6], 128, 128, 8
    $region9: #{tpu_custom_call.1} parent=1 // pred_fallthru
      _
    // Predicated region
    $region10: #{tpu_custom_call.1} parent=1 // pred_check
      _
    $region11: #{tpu_custom_call.1} parent=1 // pred_check_branch
      %39 = sbr.rel (0) target = $region13
    $region12: #{tpu_custom_call.1} parent=1 // pred_region
      _
    $region13: #{tpu_custom_call.1} parent=1 // pred_fallthru
      _
    // Predicated region
    $region14: #{tpu_custom_call.1} parent=1 // pred_check
      _
    $region15: #{tpu_custom_call.1} parent=1 // pred_check_branch
      %41 = sbr.rel (0) target = $region17
    $region16: #{tpu_custom_call.1} parent=1 // pred_region
      %s43 = ssub.s32 4096, 4096
      %44 = vsyncadd [#allocation6], %s43
      %s45 = sshll.u32 [#allocation7], 4
      %s46 = int_to_ptr.vmem [resolvable:$true] %s45
      %51 = dma.hbm_to_vmem [thread:$0]  %s3, 4096, %s46, [#allocation6], 128, 128, 8
    $region17: #{tpu_custom_call.1} parent=1 // pred_fallthru
      _
    // Predicated region
    $region18: #{tpu_custom_call.1} parent=1 // pred_check
      _
    $region19: #{tpu_custom_call.1} parent=1 // pred_check_branch
      %53 = sbr.rel (0) target = $region21
    $region20: #{tpu_custom_call.1} parent=1 // pred_region
      _
    $region21: #{tpu_custom_call.1} parent=1 // pred_fallthru
      _
    // Predicated region
    $region22: #{tpu_custom_call.1} parent=1 // pred_check
      _
    $region23: #{tpu_custom_call.1} parent=1 // pred_check_branch
      %55 = sbr.rel (0) target = $region25
    $region24: #{tpu_custom_call.1} parent=1 // pred_region
      %s57 = ssub.s32 16384, 16384
      %58 = vsyncadd [#allocation9], %s57
      %s59 = sshll.u32 [#allocation8], 4
      %s60 = int_to_ptr.vmem [resolvable:$true] %s59
      %65 = dma.hbm_to_vmem [thread:$0]  %s5, 16384, %s60, [#allocation9], 512, 512, 32
    $region25: #{tpu_custom_call.1} parent=1 // pred_fallthru
      _
    // Predicated region
    $region26: #{tpu_custom_call.1} parent=1 // pred_check
      _
    $region27: #{tpu_custom_call.1} parent=1 // pred_check_branch
      %67 = sbr.rel (0) target = $region29
    $region28: #{tpu_custom_call.1} parent=1 // pred_region
      _
    $region29: #{tpu_custom_call.1} parent=1 // pred_fallthru
      _
    // Predicated region
    $region30: #{tpu_custom_call.1} parent=1 // pred_check
      _
    $region31: #{tpu_custom_call.1} parent=1 // pred_check_branch
      %69 = sbr.rel (0) target = $region33
    $region32: #{tpu_custom_call.1} parent=1 // pred_region
      %70 = dma.done [#allocation3], 32
    $region33: #{tpu_custom_call.1} parent=1 // pred_fallthru
      _
    // Predicated region
    $region34: #{tpu_custom_call.1} parent=1 // pred_check
      _
    $region35: #{tpu_custom_call.1} parent=1 // pred_check_branch
      %72 = sbr.rel (0) target = $region37
    $region36: #{tpu_custom_call.1} parent=1 // pred_region
      %73 = dma.done [#allocation6], 512
    $region37: #{tpu_custom_call.1} parent=1 // pred_fallthru
      _
    // Predicated region
    $region38: #{tpu_custom_call.1} parent=1 // pred_check
      _
    $region39: #{tpu_custom_call.1} parent=1 // pred_check_branch
      %75 = sbr.rel (0) target = $region41
    $region40: #{tpu_custom_call.1} parent=1 // pred_region
      %76 = dma.done [#allocation6], 4096
    $region41: #{tpu_custom_call.1} parent=1 // pred_fallthru
      _
    // Predicated region
    $region42: #{tpu_custom_call.1} parent=1 // pred_check
      _
    $region43: #{tpu_custom_call.1} parent=1 // pred_check_branch
      %78 = sbr.rel (0) target = $region45
    $region44: #{tpu_custom_call.1} parent=1 // pred_region
      %79 = dma.done [#allocation9], 16384
    $region45: #{tpu_custom_call.1} parent=1 // pred_fallthru
      _
    %v81 = vld [vmem:[#allocation2] sm:$0x3]
    %v82 = vld [vmem:[#allocation5] sm:$0xff]
    %v83 = vld [vmem:[#allocation5 + $0x8] sm:$0xff]
    %v84 = vld [vmem:[#allocation5 + $0x10] sm:$0xff]
    %v85 = vld [vmem:[#allocation5 + $0x18] sm:$0xff]
    %v86 = vld [vmem:[%s2] sm:$0x3]
    %v87 = vpack.c.bf16 %v81, %v81
    %v89 = vlaneseq
    %v90 = vshrl.u32 %v89, 7
    %v91 = vsub.s32 0, %v90
    %v92 = vrot.slane %v86, %v91
    %v93 = vlaneseq
    %v94 = vshrl.u32 %v93, 7
    %v95 = vsub.s32 1, %v94
    %v96 = vrot.slane %v86, %v95
    %v103 = vunpack.c.l.b16 %v82
    %v104 = vunpack.c.h.b16 %v82
    %v105 = vunpack.c.l.b16 %v83
    %v106 = vunpack.c.h.b16 %v83
    %v107 = vunpack.c.l.b16 %v84
    %v108 = vunpack.c.h.b16 %v84
    %v109 = vunpack.c.l.b16 %v85
    %v110 = vunpack.c.h.b16 %v85
    %v111 = vpack.c.b16 %v105, %v103
    %v112 = vpack.c.b16 %v106, %v104
    %v113 = vpack.c.b16 %v109, %v107
    %v114 = vpack.c.b16 %v110, %v108
    %vm119 = vcmask 261120
    %v121 = vsel %vm119, %v87, 0
    %123 = vmatprep.subr.bf16.mxu0 %v112
    %124 = vmatpush1.bf16.msra.mxu0 %v111
    %125 = vmatprep.subr.bf16.mxu0 %v114
    %126 = vmatpush1.bf16.msra.mxu0 %v113
    %127 = vmatprep.subr.bf16.mxu0 0
    %128 = vmatpush1.bf16.msra.mxu0 0
    %129 = vmatprep.subr.bf16.mxu0 0
    %130 = vmatpush1.bf16.msra.mxu0 0
    %131 = vmatprep.subr.bf16.mxu0 0
    %132 = vmatpush1.bf16.msra.mxu0 0
    %133 = vmatprep.subr.bf16.mxu0 0
    %134 = vmatpush1.bf16.msra.mxu0 0
    %135 = vmatprep.subr.bf16.mxu0 0
    %136 = vmatpush1.bf16.msra.mxu0 0
    %137 = vmatprep.subr.bf16.mxu0 0
    %138 = vmatpush1.bf16.msra.mxu0 0
    %139 = vmatprep.subr.bf16.mxu0 0
    %140 = vmatpush1.bf16.msra.mxu0 0
    %141 = vmatprep.subr.bf16.mxu0 0
    %142 = vmatpush1.bf16.msra.mxu0 0
    %143 = vmatprep.subr.bf16.mxu0 0
    %144 = vmatpush1.bf16.msra.mxu0 0
    %145 = vmatprep.subr.bf16.mxu0 0
    %146 = vmatpush1.bf16.msra.mxu0 0
    %147 = vmatprep.subr.bf16.mxu0 0
    %148 = vmatpush1.bf16.msra.mxu0 0
    %149 = vmatprep.subr.bf16.mxu0 0
    %150 = vmatpush1.bf16.msra.mxu0 0
    %151 = vmatprep.subr.bf16.mxu0 0
    %152 = vmatpush1.bf16.msra.mxu0 0
    %153 = vmatprep.subr.bf16.mxu0 0
    %154 = vmatpush1.bf16.msra.mxu0 0
    %155 = vmatprep.mubr.bf16.mxu0 0
    %156 = vmatmul.mubr.bf16.gmra.mrb[0].mxu0 %v121
    %v157 = vpop.f32.mrb[0].mxu0
    %v158 = vadd.f32 %v92, %v157
    %v159 = vpop.f32.mrb[0].mxu0
    %v160 = vadd.f32 %v96, %v159
    %v161 = vpop.f32.mrb[0].mxu0
    %v162 = vpop.f32.mrb[0].mxu0
    %163 = vdwg.mxu0
    %v164 = vtanh.pop %v158
    %v165 = vtanh.pop %v160
    %v166 = vld [vmem:[#allocation7] sm:$0xff]
    %v167 = vld [vmem:[#allocation7 + $0x8] sm:$0xff]
    %v168 = vld [vmem:[#allocation7 + $0x10] sm:$0xff]
    %v169 = vld [vmem:[#allocation7 + $0x18] sm:$0xff]
    %v170 = vld [vmem:[#allocation7 + $0x20] sm:$0xff]
    %v171 = vld [vmem:[#allocation7 + $0x28] sm:$0xff]
    %v172 = vld [vmem:[#allocation7 + $0x30] sm:$0xff]
    %v173 = vld [vmem:[#allocation7 + $0x38] sm:$0xff]
    %v174 = vld [vmem:[#allocation7 + $0x40] sm:$0xff]
    %v175 = vld [vmem:[#allocation7 + $0x48] sm:$0xff]
    %v176 = vld [vmem:[#allocation7 + $0x50] sm:$0xff]
    %v177 = vld [vmem:[#allocation7 + $0x58] sm:$0xff]
    %v178 = vld [vmem:[#allocation7 + $0x60] sm:$0xff]
    %v179 = vld [vmem:[#allocation7 + $0x68] sm:$0xff]
    %v180 = vld [vmem:[#allocation7 + $0x70] sm:$0xff]
    %v181 = vld [vmem:[#allocation7 + $0x78] sm:$0xff]
    %v182 = vld [vmem:[#allocation7 + $0x80] sm:$0xff]
    %v183 = vld [vmem:[#allocation7 + $0x88] sm:$0xff]
    %v184 = vld [vmem:[#allocation7 + $0x90] sm:$0xff]
    %v185 = vld [vmem:[#allocation7 + $0x98] sm:$0xff]
    %v186 = vld [vmem:[#allocation7 + $0xa0] sm:$0xff]
    %v187 = vld [vmem:[#allocation7 + $0xa8] sm:$0xff]
    %v188 = vld [vmem:[#allocation7 + $0xb0] sm:$0xff]
    %v189 = vld [vmem:[#allocation7 + $0xb8] sm:$0xff]
    %v190 = vld [vmem:[#allocation7 + $0xc0] sm:$0xff]
    %v191 = vld [vmem:[#allocation7 + $0xc8] sm:$0xff]
    %v192 = vld [vmem:[#allocation7 + $0xd0] sm:$0xff]
    %v193 = vld [vmem:[#allocation7 + $0xd8] sm:$0xff]
    %v194 = vld [vmem:[#allocation7 + $0xe0] sm:$0xff]
    %v195 = vld [vmem:[#allocation7 + $0xe8] sm:$0xff]
    %v196 = vld [vmem:[#allocation7 + $0xf0] sm:$0xff]
    %v197 = vld [vmem:[#allocation7 + $0xf8] sm:$0xff]
    %v198 = vld [vmem:[%s4] sm:$0x3]
    %v199 = vpack.c.bf16 %v164, %v164
    %v200 = vpack.c.bf16 %v165, %v165
    %v202 = vlaneseq
    %v203 = vshrl.u32 %v202, 7
    %v204 = vsub.s32 0, %v203
    %v205 = vrot.slane %v198, %v204
    %v206 = vlaneseq
    %v207 = vshrl.u32 %v206, 7
    %v208 = vsub.s32 1, %v207
    %v209 = vrot.slane %v198, %v208
    %v244 = vunpack.c.l.b16 %v166
    %v245 = vunpack.c.h.b16 %v166
    %v246 = vunpack.c.l.b16 %v167
    %v247 = vunpack.c.h.b16 %v167
    %v248 = vunpack.c.l.b16 %v168
    %v249 = vunpack.c.h.b16 %v168
    %v250 = vunpack.c.l.b16 %v169
    %v251 = vunpack.c.h.b16 %v169
    %v252 = vunpack.c.l.b16 %v170
    %v253 = vunpack.c.h.b16 %v170
    %v254 = vunpack.c.l.b16 %v171
    %v255 = vunpack.c.h.b16 %v171
    %v256 = vunpack.c.l.b16 %v172
    %v257 = vunpack.c.h.b16 %v172
    %v258 = vunpack.c.l.b16 %v173
    %v259 = vunpack.c.h.b16 %v173
    %v260 = vunpack.c.l.b16 %v174
    %v261 = vunpack.c.h.b16 %v174
    %v262 = vunpack.c.l.b16 %v175
    %v263 = vunpack.c.h.b16 %v175
    %v264 = vunpack.c.l.b16 %v176
    %v265 = vunpack.c.h.b16 %v176
    %v266 = vunpack.c.l.b16 %v177
    %v267 = vunpack.c.h.b16 %v177
    %v268 = vunpack.c.l.b16 %v178
    %v269 = vunpack.c.h.b16 %v178
    %v270 = vunpack.c.l.b16 %v179
    %v271 = vunpack.c.h.b16 %v179
    %v272 = vunpack.c.l.b16 %v180
    %v273 = vunpack.c.h.b16 %v180
    %v274 = vunpack.c.l.b16 %v181
    %v275 = vunpack.c.h.b16 %v181
    %v276 = vunpack.c.l.b16 %v182
    %v277 = vunpack.c.h.b16 %v182
    %v278 = vunpack.c.l.b16 %v183
    %v279 = vunpack.c.h.b16 %v183
    %v280 = vunpack.c.l.b16 %v184
    %v281 = vunpack.c.h.b16 %v184
    %v282 = vunpack.c.l.b16 %v185
    %v283 = vunpack.c.h.b16 %v185
    %v284 = vunpack.c.l.b16 %v186
    %v285 = vunpack.c.h.b16 %v186
    %v286 = vunpack.c.l.b16 %v187
    %v287 = vunpack.c.h.b16 %v187
    %v288 = vunpack.c.l.b16 %v188
    %v289 = vunpack.c.h.b16 %v188
    %v290 = vunpack.c.l.b16 %v189
    %v291 = vunpack.c.h.b16 %v189
    %v292 = vunpack.c.l.b16 %v190
    %v293 = vunpack.c.h.b16 %v190
    %v294 = vunpack.c.l.b16 %v191
    %v295 = vunpack.c.h.b16 %v191
    %v296 = vunpack.c.l.b16 %v192
    %v297 = vunpack.c.h.b16 %v192
    %v298 = vunpack.c.l.b16 %v193
    %v299 = vunpack.c.h.b16 %v193
    %v300 = vunpack.c.l.b16 %v194
    %v301 = vunpack.c.h.b16 %v194
    %v302 = vunpack.c.l.b16 %v195
    %v303 = vunpack.c.h.b16 %v195
    %v304 = vunpack.c.l.b16 %v196
    %v305 = vunpack.c.h.b16 %v196
    %v306 = vunpack.c.l.b16 %v197
    %v307 = vunpack.c.h.b16 %v197
    %v308 = vpack.c.b16 %v246, %v244
    %v309 = vpack.c.b16 %v247, %v245
    %v310 = vpack.c.b16 %v250, %v248
    %v311 = vpack.c.b16 %v251, %v249
    %v312 = vpack.c.b16 %v254, %v252
    %v313 = vpack.c.b16 %v255, %v253
    %v314 = vpack.c.b16 %v258, %v256
    %v315 = vpack.c.b16 %v259, %v257
    %v316 = vpack.c.b16 %v262, %v260
    %v317 = vpack.c.b16 %v263, %v261
    %v318 = vpack.c.b16 %v266, %v264
    %v319 = vpack.c.b16 %v267, %v265
    %v320 = vpack.c.b16 %v270, %v268
    %v321 = vpack.c.b16 %v271, %v269
    %v322 = vpack.c.b16 %v274, %v272
    %v323 = vpack.c.b16 %v275, %v273
    %v324 = vpack.c.b16 %v278, %v276
    %v325 = vpack.c.b16 %v279, %v277
    %v326 = vpack.c.b16 %v282, %v280
    %v327 = vpack.c.b16 %v283, %v281
    %v328 = vpack.c.b16 %v286, %v284
    %v329 = vpack.c.b16 %v287, %v285
    %v330 = vpack.c.b16 %v290, %v288
    %v331 = vpack.c.b16 %v291, %v289
    %v332 = vpack.c.b16 %v294, %v292
    %v333 = vpack.c.b16 %v295, %v293
    %v334 = vpack.c.b16 %v298, %v296
    %v335 = vpack.c.b16 %v299, %v297
    %v336 = vpack.c.b16 %v302, %v300
    %v337 = vpack.c.b16 %v303, %v301
    %v338 = vpack.c.b16 %v306, %v304
    %v339 = vpack.c.b16 %v307, %v305
    %372 = vmatprep.subr.bf16.mxu0 %v309
    %373 = vmatpush1.bf16.msra.mxu0 %v308
    %374 = vmatprep.subr.bf16.mxu0 %v311
    %375 = vmatpush1.bf16.msra.mxu0 %v310
    %376 = vmatprep.subr.bf16.mxu0 %v313
    %377 = vmatpush1.bf16.msra.mxu0 %v312
    %378 = vmatprep.subr.bf16.mxu0 %v315
    %379 = vmatpush1.bf16.msra.mxu0 %v314
    %380 = vmatprep.subr.bf16.mxu0 %v317
    %381 = vmatpush1.bf16.msra.mxu0 %v316
    %382 = vmatprep.subr.bf16.mxu0 %v319
    %383 = vmatpush1.bf16.msra.mxu0 %v318
    %384 = vmatprep.subr.bf16.mxu0 %v321
    %385 = vmatpush1.bf16.msra.mxu0 %v320
    %386 = vmatprep.subr.bf16.mxu0 %v323
    %387 = vmatpush1.bf16.msra.mxu0 %v322
    %388 = vmatprep.subr.bf16.mxu0 %v325
    %389 = vmatpush1.bf16.msra.mxu0 %v324
    %390 = vmatprep.subr.bf16.mxu0 %v327
    %391 = vmatpush1.bf16.msra.mxu0 %v326
    %392 = vmatprep.subr.bf16.mxu0 %v329
    %393 = vmatpush1.bf16.msra.mxu0 %v328
    %394 = vmatprep.subr.bf16.mxu0 %v331
    %395 = vmatpush1.bf16.msra.mxu0 %v330
    %396 = vmatprep.subr.bf16.mxu0 %v333
    %397 = vmatpush1.bf16.msra.mxu0 %v332
    %398 = vmatprep.subr.bf16.mxu0 %v335
    %399 = vmatpush1.bf16.msra.mxu0 %v334
    %400 = vmatprep.subr.bf16.mxu0 %v337
    %401 = vmatpush1.bf16.msra.mxu0 %v336
    %402 = vmatprep.subr.bf16.mxu0 %v339
    %403 = vmatpush1.bf16.msra.mxu0 %v338
    %404 = vmatprep.mubr.bf16.mxu0 %v200
    %405 = vmatmul.mubr.bf16.gmra.mrb[0].mxu0 %v199
    %v406 = vpop.f32.mrb[0].mxu0
    %v407 = vadd.f32 %v205, %v406
    %v408 = vpop.f32.mrb[0].mxu0
    %v409 = vadd.f32 %v209, %v408
    %v410 = vpop.f32.mrb[0].mxu0
    %v411 = vpop.f32.mrb[0].mxu0
    %412 = vdwg.mxu0
    %v413 = vtanh.pop %v407
    %v414 = vtanh.pop %v409
    %v415 = vld [vmem:[#allocation8] sm:$0xff]
    %v416 = vld [vmem:[#allocation8 + $0x8] sm:$0xff]
    %v417 = vld [vmem:[#allocation8 + $0x10] sm:$0xff]
    %v418 = vld [vmem:[#allocation8 + $0x18] sm:$0xff]
    %v419 = vld [vmem:[#allocation8 + $0x20] sm:$0xff]
    %v420 = vld [vmem:[#allocation8 + $0x28] sm:$0xff]
    %v421 = vld [vmem:[#allocation8 + $0x30] sm:$0xff]
    %v422 = vld [vmem:[#allocation8 + $0x38] sm:$0xff]
    %v423 = vld [vmem:[#allocation8 + $0x40] sm:$0xff]
    %v424 = vld [vmem:[#allocation8 + $0x48] sm:$0xff]
    %v425 = vld [vmem:[#allocation8 + $0x50] sm:$0xff]
    %v426 = vld [vmem:[#allocation8 + $0x58] sm:$0xff]
    %v427 = vld [vmem:[#allocation8 + $0x60] sm:$0xff]
    %v428 = vld [vmem:[#allocation8 + $0x68] sm:$0xff]
    %v429 = vld [vmem:[#allocation8 + $0x70] sm:$0xff]
    %v430 = vld [vmem:[#allocation8 + $0x78] sm:$0xff]
    %v431 = vld [vmem:[#allocation8 + $0x80] sm:$0xff]
    %v432 = vld [vmem:[#allocation8 + $0x88] sm:$0xff]
    %v433 = vld [vmem:[#allocation8 + $0x90] sm:$0xff]
    %v434 = vld [vmem:[#allocation8 + $0x98] sm:$0xff]
    %v435 = vld [vmem:[#allocation8 + $0xa0] sm:$0xff]
    %v436 = vld [vmem:[#allocation8 + $0xa8] sm:$0xff]
    %v437 = vld [vmem:[#allocation8 + $0xb0] sm:$0xff]
    %v438 = vld [vmem:[#allocation8 + $0xb8] sm:$0xff]
    %v439 = vld [vmem:[#allocation8 + $0xc0] sm:$0xff]
    %v440 = vld [vmem:[#allocation8 + $0xc8] sm:$0xff]
    %v441 = vld [vmem:[#allocation8 + $0xd0] sm:$0xff]
    %v442 = vld [vmem:[#allocation8 + $0xd8] sm:$0xff]
    %v443 = vld [vmem:[#allocation8 + $0xe0] sm:$0xff]
    %v444 = vld [vmem:[#allocation8 + $0xe8] sm:$0xff]
    %v445 = vld [vmem:[#allocation8 + $0xf0] sm:$0xff]
    %v446 = vld [vmem:[#allocation8 + $0xf8] sm:$0xff]
    %v447 = vld [vmem:[#allocation8 + $0x100] sm:$0xff]
    %v448 = vld [vmem:[#allocation8 + $0x108] sm:$0xff]
    %v449 = vld [vmem:[#allocation8 + $0x110] sm:$0xff]
    %v450 = vld [vmem:[#allocation8 + $0x118] sm:$0xff]
    %v451 = vld [vmem:[#allocation8 + $0x120] sm:$0xff]
    %v452 = vld [vmem:[#allocation8 + $0x128] sm:$0xff]
    %v453 = vld [vmem:[#allocation8 + $0x130] sm:$0xff]
    %v454 = vld [vmem:[#allocation8 + $0x138] sm:$0xff]
    %v455 = vld [vmem:[#allocation8 + $0x140] sm:$0xff]
    %v456 = vld [vmem:[#allocation8 + $0x148] sm:$0xff]
    %v457 = vld [vmem:[#allocation8 + $0x150] sm:$0xff]
    %v458 = vld [vmem:[#allocation8 + $0x158] sm:$0xff]
    %v459 = vld [vmem:[#allocation8 + $0x160] sm:$0xff]
    %v460 = vld [vmem:[#allocation8 + $0x168] sm:$0xff]
    %v461 = vld [vmem:[#allocation8 + $0x170] sm:$0xff]
    %v462 = vld [vmem:[#allocation8 + $0x178] sm:$0xff]
    %v463 = vld [vmem:[#allocation8 + $0x180] sm:$0xff]
    %v464 = vld [vmem:[#allocation8 + $0x188] sm:$0xff]
    %v465 = vld [vmem:[#allocation8 + $0x190] sm:$0xff]
    %v466 = vld [vmem:[#allocation8 + $0x198] sm:$0xff]
    %v467 = vld [vmem:[#allocation8 + $0x1a0] sm:$0xff]
    %v468 = vld [vmem:[#allocation8 + $0x1a8] sm:$0xff]
    %v469 = vld [vmem:[#allocation8 + $0x1b0] sm:$0xff]
    %v470 = vld [vmem:[#allocation8 + $0x1b8] sm:$0xff]
    %v471 = vld [vmem:[#allocation8 + $0x1c0] sm:$0xff]
    %v472 = vld [vmem:[#allocation8 + $0x1c8] sm:$0xff]
    %v473 = vld [vmem:[#allocation8 + $0x1d0] sm:$0xff]
    %v474 = vld [vmem:[#allocation8 + $0x1d8] sm:$0xff]
    %v475 = vld [vmem:[#allocation8 + $0x1e0] sm:$0xff]
    %v476 = vld [vmem:[#allocation8 + $0x1e8] sm:$0xff]
    %v477 = vld [vmem:[#allocation8 + $0x1f0] sm:$0xff]
    %v478 = vld [vmem:[#allocation8 + $0x1f8] sm:$0xff]
    %v479 = vld [vmem:[#allocation8 + $0x200] sm:$0xff]
    %v480 = vld [vmem:[#allocation8 + $0x208] sm:$0xff]
    %v481 = vld [vmem:[#allocation8 + $0x210] sm:$0xff]
    %v482 = vld [vmem:[#allocation8 + $0x218] sm:$0xff]
    %v483 = vld [vmem:[#allocation8 + $0x220] sm:$0xff]
    %v484 = vld [vmem:[#allocation8 + $0x228] sm:$0xff]
    %v485 = vld [vmem:[#allocation8 + $0x230] sm:$0xff]
    %v486 = vld [vmem:[#allocation8 + $0x238] sm:$0xff]
    %v487 = vld [vmem:[#allocation8 + $0x240] sm:$0xff]
    %v488 = vld [vmem:[#allocation8 + $0x248] sm:$0xff]
    %v489 = vld [vmem:[#allocation8 + $0x250] sm:$0xff]
    %v490 = vld [vmem:[#allocation8 + $0x258] sm:$0xff]
    %v491 = vld [vmem:[#allocation8 + $0x260] sm:$0xff]
    %v492 = vld [vmem:[#allocation8 + $0x268] sm:$0xff]
    %v493 = vld [vmem:[#allocation8 + $0x270] sm:$0xff]
    %v494 = vld [vmem:[#allocation8 + $0x278] sm:$0xff]
    %v495 = vld [vmem:[#allocation8 + $0x280] sm:$0xff]
    %v496 = vld [vmem:[#allocation8 + $0x288] sm:$0xff]
    %v497 = vld [vmem:[#allocation8 + $0x290] sm:$0xff]
    %v498 = vld [vmem:[#allocation8 + $0x298] sm:$0xff]
    %v499 = vld [vmem:[#allocation8 + $0x2a0] sm:$0xff]
    %v500 = vld [vmem:[#allocation8 + $0x2a8] sm:$0xff]
    %v501 = vld [vmem:[#allocation8 + $0x2b0] sm:$0xff]
    %v502 = vld [vmem:[#allocation8 + $0x2b8] sm:$0xff]
    %v503 = vld [vmem:[#allocation8 + $0x2c0] sm:$0xff]
    %v504 = vld [vmem:[#allocation8 + $0x2c8] sm:$0xff]
    %v505 = vld [vmem:[#allocation8 + $0x2d0] sm:$0xff]
    %v506 = vld [vmem:[#allocation8 + $0x2d8] sm:$0xff]
    %v507 = vld [vmem:[#allocation8 + $0x2e0] sm:$0xff]
    %v508 = vld [vmem:[#allocation8 + $0x2e8] sm:$0xff]
    %v509 = vld [vmem:[#allocation8 + $0x2f0] sm:$0xff]
    %v510 = vld [vmem:[#allocation8 + $0x2f8] sm:$0xff]
    %v511 = vld [vmem:[#allocation8 + $0x300] sm:$0xff]
    %v512 = vld [vmem:[#allocation8 + $0x308] sm:$0xff]
    %v513 = vld [vmem:[#allocation8 + $0x310] sm:$0xff]
    %v514 = vld [vmem:[#allocation8 + $0x318] sm:$0xff]
    %v515 = vld [vmem:[#allocation8 + $0x320] sm:$0xff]
    %v516 = vld [vmem:[#allocation8 + $0x328] sm:$0xff]
    %v517 = vld [vmem:[#allocation8 + $0x330] sm:$0xff]
    %v518 = vld [vmem:[#allocation8 + $0x338] sm:$0xff]
    %v519 = vld [vmem:[#allocation8 + $0x340] sm:$0xff]
    %v520 = vld [vmem:[#allocation8 + $0x348] sm:$0xff]
    %v521 = vld [vmem:[#allocation8 + $0x350] sm:$0xff]
    %v522 = vld [vmem:[#allocation8 + $0x358] sm:$0xff]
    %v523 = vld [vmem:[#allocation8 + $0x360] sm:$0xff]
    %v524 = vld [vmem:[#allocation8 + $0x368] sm:$0xff]
    %v525 = vld [vmem:[#allocation8 + $0x370] sm:$0xff]
    %v526 = vld [vmem:[#allocation8 + $0x378] sm:$0xff]
    %v527 = vld [vmem:[#allocation8 + $0x380] sm:$0xff]
    %v528 = vld [vmem:[#allocation8 + $0x388] sm:$0xff]
    %v529 = vld [vmem:[#allocation8 + $0x390] sm:$0xff]
    %v530 = vld [vmem:[#allocation8 + $0x398] sm:$0xff]
    %v531 = vld [vmem:[#allocation8 + $0x3a0] sm:$0xff]
    %v532 = vld [vmem:[#allocation8 + $0x3a8] sm:$0xff]
    %v533 = vld [vmem:[#allocation8 + $0x3b0] sm:$0xff]
    %v534 = vld [vmem:[#allocation8 + $0x3b8] sm:$0xff]
    %v535 = vld [vmem:[#allocation8 + $0x3c0] sm:$0xff]
    %v536 = vld [vmem:[#allocation8 + $0x3c8] sm:$0xff]
    %v537 = vld [vmem:[#allocation8 + $0x3d0] sm:$0xff]
    %v538 = vld [vmem:[#allocation8 + $0x3d8] sm:$0xff]
    %v539 = vld [vmem:[#allocation8 + $0x3e0] sm:$0xff]
    %v540 = vld [vmem:[#allocation8 + $0x3e8] sm:$0xff]
    %v541 = vld [vmem:[#allocation8 + $0x3f0] sm:$0xff]
    %v542 = vld [vmem:[#allocation8 + $0x3f8] sm:$0xff]
    %v543 = vld [vmem:[%s6] sm:$0xff]
    %v544 = vpack.c.bf16 %v413, %v413
    %v545 = vpack.c.bf16 %v414, %v414
    %v547 = vlaneseq
    %v548 = vshrl.u32 %v547, 7
    %v549 = vsub.s32 0, %v548
    %v550 = vrot.slane %v543, %v549
    %v551 = vlaneseq
    %v552 = vshrl.u32 %v551, 7
    %v553 = vsub.s32 1, %v552
    %v554 = vrot.slane %v543, %v553
    %v555 = vlaneseq
    %v556 = vshrl.u32 %v555, 7
    %v557 = vsub.s32 2, %v556
    %v558 = vrot.slane %v543, %v557
    %v559 = vlaneseq
    %v560 = vshrl.u32 %v559, 7
    %v561 = vsub.s32 3, %v560
    %v562 = vrot.slane %v543, %v561
    %v563 = vlaneseq
    %v564 = vshrl.u32 %v563, 7
    %v565 = vsub.s32 4, %v564
    %v566 = vrot.slane %v543, %v565
    %v567 = vlaneseq
    %v568 = vshrl.u32 %v567, 7
    %v569 = vsub.s32 5, %v568
    %v570 = vrot.slane %v543, %v569
    %v571 = vlaneseq
    %v572 = vshrl.u32 %v571, 7
    %v573 = vsub.s32 6, %v572
    %v574 = vrot.slane %v543, %v573
    %v575 = vlaneseq
    %v576 = vshrl.u32 %v575, 7
    %v577 = vsub.s32 7, %v576
    %v578 = vrot.slane %v543, %v577
    %v715 = vunpack.c.l.b16 %v415
    %v716 = vunpack.c.h.b16 %v415
    %v717 = vunpack.c.l.b16 %v416
    %v718 = vunpack.c.h.b16 %v416
    %v719 = vunpack.c.l.b16 %v417
    %v720 = vunpack.c.h.b16 %v417
    %v721 = vunpack.c.l.b16 %v418
    %v722 = vunpack.c.h.b16 %v418
    %v723 = vunpack.c.l.b16 %v419
    %v724 = vunpack.c.h.b16 %v419
    %v725 = vunpack.c.l.b16 %v420
    %v726 = vunpack.c.h.b16 %v420
    %v727 = vunpack.c.l.b16 %v421
    %v728 = vunpack.c.h.b16 %v421
    %v729 = vunpack.c.l.b16 %v422
    %v730 = vunpack.c.h.b16 %v422
    %v731 = vunpack.c.l.b16 %v423
    %v732 = vunpack.c.h.b16 %v423
    %v733 = vunpack.c.l.b16 %v424
    %v734 = vunpack.c.h.b16 %v424
    %v735 = vunpack.c.l.b16 %v425
    %v736 = vunpack.c.h.b16 %v425
    %v737 = vunpack.c.l.b16 %v426
    %v738 = vunpack.c.h.b16 %v426
    %v739 = vunpack.c.l.b16 %v427
    %v740 = vunpack.c.h.b16 %v427
    %v741 = vunpack.c.l.b16 %v428
    %v742 = vunpack.c.h.b16 %v428
    %v743 = vunpack.c.l.b16 %v429
    %v744 = vunpack.c.h.b16 %v429
    %v745 = vunpack.c.l.b16 %v430
    %v746 = vunpack.c.h.b16 %v430
    %v747 = vunpack.c.l.b16 %v431
    %v748 = vunpack.c.h.b16 %v431
    %v749 = vunpack.c.l.b16 %v432
    %v750 = vunpack.c.h.b16 %v432
    %v751 = vunpack.c.l.b16 %v433
    %v752 = vunpack.c.h.b16 %v433
    %v753 = vunpack.c.l.b16 %v434
    %v754 = vunpack.c.h.b16 %v434
    %v755 = vunpack.c.l.b16 %v435
    %v756 = vunpack.c.h.b16 %v435
    %v757 = vunpack.c.l.b16 %v436
    %v758 = vunpack.c.h.b16 %v436
    %v759 = vunpack.c.l.b16 %v437
    %v760 = vunpack.c.h.b16 %v437
    %v761 = vunpack.c.l.b16 %v438
    %v762 = vunpack.c.h.b16 %v438
    %v763 = vunpack.c.l.b16 %v439
    %v764 = vunpack.c.h.b16 %v439
    %v765 = vunpack.c.l.b16 %v440
    %v766 = vunpack.c.h.b16 %v440
    %v767 = vunpack.c.l.b16 %v441
    %v768 = vunpack.c.h.b16 %v441
    %v769 = vunpack.c.l.b16 %v442
    %v770 = vunpack.c.h.b16 %v442
    %v771 = vunpack.c.l.b16 %v443
    %v772 = vunpack.c.h.b16 %v443
    %v773 = vunpack.c.l.b16 %v444
    %v774 = vunpack.c.h.b16 %v444
    %v775 = vunpack.c.l.b16 %v445
    %v776 = vunpack.c.h.b16 %v445
    %v777 = vunpack.c.l.b16 %v446
    %v778 = vunpack.c.h.b16 %v446
    %v779 = vunpack.c.l.b16 %v447
    %v780 = vunpack.c.h.b16 %v447
    %v781 = vunpack.c.l.b16 %v448
    %v782 = vunpack.c.h.b16 %v448
    %v783 = vunpack.c.l.b16 %v449
    %v784 = vunpack.c.h.b16 %v449
    %v785 = vunpack.c.l.b16 %v450
    %v786 = vunpack.c.h.b16 %v450
    %v787 = vunpack.c.l.b16 %v451
    %v788 = vunpack.c.h.b16 %v451
    %v789 = vunpack.c.l.b16 %v452
    %v790 = vunpack.c.h.b16 %v452
    %v791 = vunpack.c.l.b16 %v453
    %v792 = vunpack.c.h.b16 %v453
    %v793 = vunpack.c.l.b16 %v454
    %v794 = vunpack.c.h.b16 %v454
    %v795 = vunpack.c.l.b16 %v455
    %v796 = vunpack.c.h.b16 %v455
    %v797 = vunpack.c.l.b16 %v456
    %v798 = vunpack.c.h.b16 %v456
    %v799 = vunpack.c.l.b16 %v457
    %v800 = vunpack.c.h.b16 %v457
    %v801 = vunpack.c.l.b16 %v458
    %v802 = vunpack.c.h.b16 %v458
    %v803 = vunpack.c.l.b16 %v459
    %v804 = vunpack.c.h.b16 %v459
    %v805 = vunpack.c.l.b16 %v460
    %v806 = vunpack.c.h.b16 %v460
    %v807 = vunpack.c.l.b16 %v461
    %v808 = vunpack.c.h.b16 %v461
    %v809 = vunpack.c.l.b16 %v462
    %v810 = vunpack.c.h.b16 %v462
    %v811 = vunpack.c.l.b16 %v463
    %v812 = vunpack.c.h.b16 %v463
    %v813 = vunpack.c.l.b16 %v464
    %v814 = vunpack.c.h.b16 %v464
    %v815 = vunpack.c.l.b16 %v465
    %v816 = vunpack.c.h.b16 %v465
    %v817 = vunpack.c.l.b16 %v466
    %v818 = vunpack.c.h.b16 %v466
    %v819 = vunpack.c.l.b16 %v467
    %v820 = vunpack.c.h.b16 %v467
    %v821 = vunpack.c.l.b16 %v468
    %v822 = vunpack.c.h.b16 %v468
    %v823 = vunpack.c.l.b16 %v469
    %v824 = vunpack.c.h.b16 %v469
    %v825 = vunpack.c.l.b16 %v470
    %v826 = vunpack.c.h.b16 %v470
    %v827 = vunpack.c.l.b16 %v471
    %v828 = vunpack.c.h.b16 %v471
    %v829 = vunpack.c.l.b16 %v472
    %v830 = vunpack.c.h.b16 %v472
    %v831 = vunpack.c.l.b16 %v473
    %v832 = vunpack.c.h.b16 %v473
    %v833 = vunpack.c.l.b16 %v474
    %v834 = vunpack.c.h.b16 %v474
    %v835 = vunpack.c.l.b16 %v475
    %v836 = vunpack.c.h.b16 %v475
    %v837 = vunpack.c.l.b16 %v476
    %v838 = vunpack.c.h.b16 %v476
    %v839 = vunpack.c.l.b16 %v477
    %v840 = vunpack.c.h.b16 %v477
    %v841 = vunpack.c.l.b16 %v478
    %v842 = vunpack.c.h.b16 %v478
    %v843 = vunpack.c.l.b16 %v479
    %v844 = vunpack.c.h.b16 %v479
    %v845 = vunpack.c.l.b16 %v480
    %v846 = vunpack.c.h.b16 %v480
    %v847 = vunpack.c.l.b16 %v481
    %v848 = vunpack.c.h.b16 %v481
    %v849 = vunpack.c.l.b16 %v482
    %v850 = vunpack.c.h.b16 %v482
    %v851 = vunpack.c.l.b16 %v483
    %v852 = vunpack.c.h.b16 %v483
    %v853 = vunpack.c.l.b16 %v484
    %v854 = vunpack.c.h.b16 %v484
    %v855 = vunpack.c.l.b16 %v485
    %v856 = vunpack.c.h.b16 %v485
    %v857 = vunpack.c.l.b16 %v486
    %v858 = vunpack.c.h.b16 %v486
    %v859 = vunpack.c.l.b16 %v487
    %v860 = vunpack.c.h.b16 %v487
    %v861 = vunpack.c.l.b16 %v488
    %v862 = vunpack.c.h.b16 %v488
    %v863 = vunpack.c.l.b16 %v489
    %v864 = vunpack.c.h.b16 %v489
    %v865 = vunpack.c.l.b16 %v490
    %v866 = vunpack.c.h.b16 %v490
    %v867 = vunpack.c.l.b16 %v491
    %v868 = vunpack.c.h.b16 %v491
    %v869 = vunpack.c.l.b16 %v492
    %v870 = vunpack.c.h.b16 %v492
    %v871 = vunpack.c.l.b16 %v493
    %v872 = vunpack.c.h.b16 %v493
    %v873 = vunpack.c.l.b16 %v494
    %v874 = vunpack.c.h.b16 %v494
    %v875 = vunpack.c.l.b16 %v495
    %v876 = vunpack.c.h.b16 %v495
    %v877 = vunpack.c.l.b16 %v496
    %v878 = vunpack.c.h.b16 %v496
    %v879 = vunpack.c.l.b16 %v497
    %v880 = vunpack.c.h.b16 %v497
    %v881 = vunpack.c.l.b16 %v498
    %v882 = vunpack.c.h.b16 %v498
    %v883 = vunpack.c.l.b16 %v499
    %v884 = vunpack.c.h.b16 %v499
    %v885 = vunpack.c.l.b16 %v500
    %v886 = vunpack.c.h.b16 %v500
    %v887 = vunpack.c.l.b16 %v501
    %v888 = vunpack.c.h.b16 %v501
    %v889 = vunpack.c.l.b16 %v502
    %v890 = vunpack.c.h.b16 %v502
    %v891 = vunpack.c.l.b16 %v503
    %v892 = vunpack.c.h.b16 %v503
    %v893 = vunpack.c.l.b16 %v504
    %v894 = vunpack.c.h.b16 %v504
    %v895 = vunpack.c.l.b16 %v505
    %v896 = vunpack.c.h.b16 %v505
    %v897 = vunpack.c.l.b16 %v506
    %v898 = vunpack.c.h.b16 %v506
    %v899 = vunpack.c.l.b16 %v507
    %v900 = vunpack.c.h.b16 %v507
    %v901 = vunpack.c.l.b16 %v508
    %v902 = vunpack.c.h.b16 %v508
    %v903 = vunpack.c.l.b16 %v509
    %v904 = vunpack.c.h.b16 %v509
    %v905 = vunpack.c.l.b16 %v510
    %v906 = vunpack.c.h.b16 %v510
    %v907 = vunpack.c.l.b16 %v511
    %v908 = vunpack.c.h.b16 %v511
    %v909 = vunpack.c.l.b16 %v512
    %v910 = vunpack.c.h.b16 %v512
    %v911 = vunpack.c.l.b16 %v513
    %v912 = vunpack.c.h.b16 %v513
    %v913 = vunpack.c.l.b16 %v514
    %v914 = vunpack.c.h.b16 %v514
    %v915 = vunpack.c.l.b16 %v515
    %v916 = vunpack.c.h.b16 %v515
    %v917 = vunpack.c.l.b16 %v516
    %v918 = vunpack.c.h.b16 %v516
    %v919 = vunpack.c.l.b16 %v517
    %v920 = vunpack.c.h.b16 %v517
    %v921 = vunpack.c.l.b16 %v518
    %v922 = vunpack.c.h.b16 %v518
    %v923 = vunpack.c.l.b16 %v519
    %v924 = vunpack.c.h.b16 %v519
    %v925 = vunpack.c.l.b16 %v520
    %v926 = vunpack.c.h.b16 %v520
    %v927 = vunpack.c.l.b16 %v521
    %v928 = vunpack.c.h.b16 %v521
    %v929 = vunpack.c.l.b16 %v522
    %v930 = vunpack.c.h.b16 %v522
    %v931 = vunpack.c.l.b16 %v523
    %v932 = vunpack.c.h.b16 %v523
    %v933 = vunpack.c.l.b16 %v524
    %v934 = vunpack.c.h.b16 %v524
    %v935 = vunpack.c.l.b16 %v525
    %v936 = vunpack.c.h.b16 %v525
    %v937 = vunpack.c.l.b16 %v526
    %v938 = vunpack.c.h.b16 %v526
    %v939 = vunpack.c.l.b16 %v527
    %v940 = vunpack.c.h.b16 %v527
    %v941 = vunpack.c.l.b16 %v528
    %v942 = vunpack.c.h.b16 %v528
    %v943 = vunpack.c.l.b16 %v529
    %v944 = vunpack.c.h.b16 %v529
    %v945 = vunpack.c.l.b16 %v530
    %v946 = vunpack.c.h.b16 %v530
    %v947 = vunpack.c.l.b16 %v531
    %v948 = vunpack.c.h.b16 %v531
    %v949 = vunpack.c.l.b16 %v532
    %v950 = vunpack.c.h.b16 %v532
    %v951 = vunpack.c.l.b16 %v533
    %v952 = vunpack.c.h.b16 %v533
    %v953 = vunpack.c.l.b16 %v534
    %v954 = vunpack.c.h.b16 %v534
    %v955 = vunpack.c.l.b16 %v535
    %v956 = vunpack.c.h.b16 %v535
    %v957 = vunpack.c.l.b16 %v536
    %v958 = vunpack.c.h.b16 %v536
    %v959 = vunpack.c.l.b16 %v537
    %v960 = vunpack.c.h.b16 %v537
    %v961 = vunpack.c.l.b16 %v538
    %v962 = vunpack.c.h.b16 %v538
    %v963 = vunpack.c.l.b16 %v539
    %v964 = vunpack.c.h.b16 %v539
    %v965 = vunpack.c.l.b16 %v540
    %v966 = vunpack.c.h.b16 %v540
    %v967 = vunpack.c.l.b16 %v541
    %v968 = vunpack.c.h.b16 %v541
    %v969 = vunpack.c.l.b16 %v542
    %v970 = vunpack.c.h.b16 %v542
    %v971 = vpack.c.b16 %v723, %v715
    %v972 = vpack.c.b16 %v724, %v716
    %v973 = vpack.c.b16 %v725, %v717
    %v974 = vpack.c.b16 %v726, %v718
    %v975 = vpack.c.b16 %v727, %v719
    %v976 = vpack.c.b16 %v728, %v720
    %v977 = vpack.c.b16 %v729, %v721
    %v978 = vpack.c.b16 %v730, %v722
    %v979 = vpack.c.b16 %v739, %v731
    %v980 = vpack.c.b16 %v740, %v732
    %v981 = vpack.c.b16 %v741, %v733
    %v982 = vpack.c.b16 %v742, %v734
    %v983 = vpack.c.b16 %v743, %v735
    %v984 = vpack.c.b16 %v744, %v736
    %v985 = vpack.c.b16 %v745, %v737
    %v986 = vpack.c.b16 %v746, %v738
    %v987 = vpack.c.b16 %v755, %v747
    %v988 = vpack.c.b16 %v756, %v748
    %v989 = vpack.c.b16 %v757, %v749
    %v990 = vpack.c.b16 %v758, %v750
    %v991 = vpack.c.b16 %v759, %v751
    %v992 = vpack.c.b16 %v760, %v752
    %v993 = vpack.c.b16 %v761, %v753
    %v994 = vpack.c.b16 %v762, %v754
    %v995 = vpack.c.b16 %v771, %v763
    %v996 = vpack.c.b16 %v772, %v764
    %v997 = vpack.c.b16 %v773, %v765
    %v998 = vpack.c.b16 %v774, %v766
    %v999 = vpack.c.b16 %v775, %v767
    %v1000 = vpack.c.b16 %v776, %v768
    %v1001 = vpack.c.b16 %v777, %v769
    %v1002 = vpack.c.b16 %v778, %v770
    %v1003 = vpack.c.b16 %v787, %v779
    %v1004 = vpack.c.b16 %v788, %v780
    %v1005 = vpack.c.b16 %v789, %v781
    %v1006 = vpack.c.b16 %v790, %v782
    %v1007 = vpack.c.b16 %v791, %v783
    %v1008 = vpack.c.b16 %v792, %v784
    %v1009 = vpack.c.b16 %v793, %v785
    %v1010 = vpack.c.b16 %v794, %v786
    %v1011 = vpack.c.b16 %v803, %v795
    %v1012 = vpack.c.b16 %v804, %v796
    %v1013 = vpack.c.b16 %v805, %v797
    %v1014 = vpack.c.b16 %v806, %v798
    %v1015 = vpack.c.b16 %v807, %v799
    %v1016 = vpack.c.b16 %v808, %v800
    %v1017 = vpack.c.b16 %v809, %v801
    %v1018 = vpack.c.b16 %v810, %v802
    %v1019 = vpack.c.b16 %v819, %v811
    %v1020 = vpack.c.b16 %v820, %v812
    %v1021 = vpack.c.b16 %v821, %v813
    %v1022 = vpack.c.b16 %v822, %v814
    %v1023 = vpack.c.b16 %v823, %v815
    %v1024 = vpack.c.b16 %v824, %v816
    %v1025 = vpack.c.b16 %v825, %v817
    %v1026 = vpack.c.b16 %v826, %v818
    %v1027 = vpack.c.b16 %v835, %v827
    %v1028 = vpack.c.b16 %v836, %v828
    %v1029 = vpack.c.b16 %v837, %v829
    %v1030 = vpack.c.b16 %v838, %v830
    %v1031 = vpack.c.b16 %v839, %v831
    %v1032 = vpack.c.b16 %v840, %v832
    %v1033 = vpack.c.b16 %v841, %v833
    %v1034 = vpack.c.b16 %v842, %v834
    %v1035 = vpack.c.b16 %v851, %v843
    %v1036 = vpack.c.b16 %v852, %v844
    %v1037 = vpack.c.b16 %v853, %v845
    %v1038 = vpack.c.b16 %v854, %v846
    %v1039 = vpack.c.b16 %v855, %v847
    %v1040 = vpack.c.b16 %v856, %v848
    %v1041 = vpack.c.b16 %v857, %v849
    %v1042 = vpack.c.b16 %v858, %v850
    %v1043 = vpack.c.b16 %v867, %v859
    %v1044 = vpack.c.b16 %v868, %v860
    %v1045 = vpack.c.b16 %v869, %v861
    %v1046 = vpack.c.b16 %v870, %v862
    %v1047 = vpack.c.b16 %v871, %v863
    %v1048 = vpack.c.b16 %v872, %v864
    %v1049 = vpack.c.b16 %v873, %v865
    %v1050 = vpack.c.b16 %v874, %v866
    %v1051 = vpack.c.b16 %v883, %v875
    %v1052 = vpack.c.b16 %v884, %v876
    %v1053 = vpack.c.b16 %v885, %v877
    %v1054 = vpack.c.b16 %v886, %v878
    %v1055 = vpack.c.b16 %v887, %v879
    %v1056 = vpack.c.b16 %v888, %v880
    %v1057 = vpack.c.b16 %v889, %v881
    %v1058 = vpack.c.b16 %v890, %v882
    %v1059 = vpack.c.b16 %v899, %v891
    %v1060 = vpack.c.b16 %v900, %v892
    %v1061 = vpack.c.b16 %v901, %v893
    %v1062 = vpack.c.b16 %v902, %v894
    %v1063 = vpack.c.b16 %v903, %v895
    %v1064 = vpack.c.b16 %v904, %v896
    %v1065 = vpack.c.b16 %v905, %v897
    %v1066 = vpack.c.b16 %v906, %v898
    %v1067 = vpack.c.b16 %v915, %v907
    %v1068 = vpack.c.b16 %v916, %v908
    %v1069 = vpack.c.b16 %v917, %v909
    %v1070 = vpack.c.b16 %v918, %v910
    %v1071 = vpack.c.b16 %v919, %v911
    %v1072 = vpack.c.b16 %v920, %v912
    %v1073 = vpack.c.b16 %v921, %v913
    %v1074 = vpack.c.b16 %v922, %v914
    %v1075 = vpack.c.b16 %v931, %v923
    %v1076 = vpack.c.b16 %v932, %v924
    %v1077 = vpack.c.b16 %v933, %v925
    %v1078 = vpack.c.b16 %v934, %v926
    %v1079 = vpack.c.b16 %v935, %v927
    %v1080 = vpack.c.b16 %v936, %v928
    %v1081 = vpack.c.b16 %v937, %v929
    %v1082 = vpack.c.b16 %v938, %v930
    %v1083 = vpack.c.b16 %v947, %v939
    %v1084 = vpack.c.b16 %v948, %v940
    %v1085 = vpack.c.b16 %v949, %v941
    %v1086 = vpack.c.b16 %v950, %v942
    %v1087 = vpack.c.b16 %v951, %v943
    %v1088 = vpack.c.b16 %v952, %v944
    %v1089 = vpack.c.b16 %v953, %v945
    %v1090 = vpack.c.b16 %v954, %v946
    %v1091 = vpack.c.b16 %v963, %v955
    %v1092 = vpack.c.b16 %v964, %v956
    %v1093 = vpack.c.b16 %v965, %v957
    %v1094 = vpack.c.b16 %v966, %v958
    %v1095 = vpack.c.b16 %v967, %v959
    %v1096 = vpack.c.b16 %v968, %v960
    %v1097 = vpack.c.b16 %v969, %v961
    %v1098 = vpack.c.b16 %v970, %v962
    %1227 = vmatprep.subr.bf16.mxu0 %v972
    %1228 = vmatpush1.bf16.msra.mxu0 %v971
    %1229 = vmatprep.subr.bf16.mxu0 %v980
    %1230 = vmatpush1.bf16.msra.mxu0 %v979
    %1231 = vmatprep.subr.bf16.mxu0 %v988
    %1232 = vmatpush1.bf16.msra.mxu0 %v987
    %1233 = vmatprep.subr.bf16.mxu0 %v996
    %1234 = vmatpush1.bf16.msra.mxu0 %v995
    %1235 = vmatprep.subr.bf16.mxu0 %v1004
    %1236 = vmatpush1.bf16.msra.mxu0 %v1003
    %1237 = vmatprep.subr.bf16.mxu0 %v1012
    %1238 = vmatpush1.bf16.msra.mxu0 %v1011
    %1239 = vmatprep.subr.bf16.mxu0 %v1020
    %1240 = vmatpush1.bf16.msra.mxu0 %v1019
    %1241 = vmatprep.subr.bf16.mxu0 %v1028
    %1242 = vmatpush1.bf16.msra.mxu0 %v1027
    %1243 = vmatprep.subr.bf16.mxu0 %v1036
    %1244 = vmatpush1.bf16.msra.mxu0 %v1035
    %1245 = vmatprep.subr.bf16.mxu0 %v1044
    %1246 = vmatpush1.bf16.msra.mxu0 %v1043
    %1247 = vmatprep.subr.bf16.mxu0 %v1052
    %1248 = vmatpush1.bf16.msra.mxu0 %v1051
    %1249 = vmatprep.subr.bf16.mxu0 %v1060
    %1250 = vmatpush1.bf16.msra.mxu0 %v1059
    %1251 = vmatprep.subr.bf16.mxu0 %v1068
    %1252 = vmatpush1.bf16.msra.mxu0 %v1067
    %1253 = vmatprep.subr.bf16.mxu0 %v1076
    %1254 = vmatpush1.bf16.msra.mxu0 %v1075
    %1255 = vmatprep.subr.bf16.mxu0 %v1084
    %1256 = vmatpush1.bf16.msra.mxu0 %v1083
    %1257 = vmatprep.subr.bf16.mxu0 %v1092
    %1258 = vmatpush1.bf16.msra.mxu0 %v1091
    %1259 = vmatprep.mubr.bf16.mxu0 %v545
    %1260 = vmatmul.mubr.bf16.gmra.mrb[0].mxu0 %v544
    %v1261 = vpop.f32.mrb[0].mxu0
    %v1262 = vadd.f32 %v550, %v1261
    %v1263 = vpop.f32.mrb[0].mxu0
    %v1264 = vadd.f32 %v554, %v1263
    %v1265 = vpop.f32.mrb[0].mxu0
    %v1266 = vpop.f32.mrb[0].mxu0
    %1267 = vdwg.mxu0
    %1268 = vmatprep.subr.bf16.mxu0 %v974
    %1269 = vmatpush1.bf16.msra.mxu0 %v973
    %1270 = vmatprep.subr.bf16.mxu0 %v982
    %1271 = vmatpush1.bf16.msra.mxu0 %v981
    %1272 = vmatprep.subr.bf16.mxu0 %v990
    %1273 = vmatpush1.bf16.msra.mxu0 %v989
    %1274 = vmatprep.subr.bf16.mxu0 %v998
    %1275 = vmatpush1.bf16.msra.mxu0 %v997
    %1276 = vmatprep.subr.bf16.mxu0 %v1006
    %1277 = vmatpush1.bf16.msra.mxu0 %v1005
    %1278 = vmatprep.subr.bf16.mxu0 %v1014
    %1279 = vmatpush1.bf16.msra.mxu0 %v1013
    %1280 = vmatprep.subr.bf16.mxu0 %v1022
    %1281 = vmatpush1.bf16.msra.mxu0 %v1021
    %1282 = vmatprep.subr.bf16.mxu0 %v1030
    %1283 = vmatpush1.bf16.msra.mxu0 %v1029
    %1284 = vmatprep.subr.bf16.mxu0 %v1038
    %1285 = vmatpush1.bf16.msra.mxu0 %v1037
    %1286 = vmatprep.subr.bf16.mxu0 %v1046
    %1287 = vmatpush1.bf16.msra.mxu0 %v1045
    %1288 = vmatprep.subr.bf16.mxu0 %v1054
    %1289 = vmatpush1.bf16.msra.mxu0 %v1053
    %1290 = vmatprep.subr.bf16.mxu0 %v1062
    %1291 = vmatpush1.bf16.msra.mxu0 %v1061
    %1292 = vmatprep.subr.bf16.mxu0 %v1070
    %1293 = vmatpush1.bf16.msra.mxu0 %v1069
    %1294 = vmatprep.subr.bf16.mxu0 %v1078
    %1295 = vmatpush1.bf16.msra.mxu0 %v1077
    %1296 = vmatprep.subr.bf16.mxu0 %v1086
    %1297 = vmatpush1.bf16.msra.mxu0 %v1085
    %1298 = vmatprep.subr.bf16.mxu0 %v1094
    %1299 = vmatpush1.bf16.msra.mxu0 %v1093
    %1300 = vmatprep.mubr.bf16.mxu0 %v545
    %1301 = vmatmul.mubr.bf16.gmra.mrb[0].mxu0 %v544
    %v1302 = vpop.f32.mrb[0].mxu0
    %v1303 = vadd.f32 %v558, %v1302
    %v1304 = vpop.f32.mrb[0].mxu0
    %v1305 = vadd.f32 %v562, %v1304
    %v1306 = vpop.f32.mrb[0].mxu0
    %v1307 = vpop.f32.mrb[0].mxu0
    %1308 = vdwg.mxu0
    %1309 = vmatprep.subr.bf16.mxu0 %v976
    %1310 = vmatpush1.bf16.msra.mxu0 %v975
    %1311 = vmatprep.subr.bf16.mxu0 %v984
    %1312 = vmatpush1.bf16.msra.mxu0 %v983
    %1313 = vmatprep.subr.bf16.mxu0 %v992
    %1314 = vmatpush1.bf16.msra.mxu0 %v991
    %1315 = vmatprep.subr.bf16.mxu0 %v1000
    %1316 = vmatpush1.bf16.msra.mxu0 %v999
    %1317 = vmatprep.subr.bf16.mxu0 %v1008
    %1318 = vmatpush1.bf16.msra.mxu0 %v1007
    %1319 = vmatprep.subr.bf16.mxu0 %v1016
    %1320 = vmatpush1.bf16.msra.mxu0 %v1015
    %1321 = vmatprep.subr.bf16.mxu0 %v1024
    %1322 = vmatpush1.bf16.msra.mxu0 %v1023
    %1323 = vmatprep.subr.bf16.mxu0 %v1032
    %1324 = vmatpush1.bf16.msra.mxu0 %v1031
    %1325 = vmatprep.subr.bf16.mxu0 %v1040
    %1326 = vmatpush1.bf16.msra.mxu0 %v1039
    %1327 = vmatprep.subr.bf16.mxu0 %v1048
    %1328 = vmatpush1.bf16.msra.mxu0 %v1047
    %1329 = vmatprep.subr.bf16.mxu0 %v1056
    %1330 = vmatpush1.bf16.msra.mxu0 %v1055
    %1331 = vmatprep.subr.bf16.mxu0 %v1064
    %1332 = vmatpush1.bf16.msra.mxu0 %v1063
    %1333 = vmatprep.subr.bf16.mxu0 %v1072
    %1334 = vmatpush1.bf16.msra.mxu0 %v1071
    %1335 = vmatprep.subr.bf16.mxu0 %v1080
    %1336 = vmatpush1.bf16.msra.mxu0 %v1079
    %1337 = vmatprep.subr.bf16.mxu0 %v1088
    %1338 = vmatpush1.bf16.msra.mxu0 %v1087
    %1339 = vmatprep.subr.bf16.mxu0 %v1096
    %1340 = vmatpush1.bf16.msra.mxu0 %v1095
    %1341 = vmatprep.mubr.bf16.mxu0 %v545
    %1342 = vmatmul.mubr.bf16.gmra.mrb[0].mxu0 %v544
    %v1343 = vpop.f32.mrb[0].mxu0
    %v1344 = vadd.f32 %v566, %v1343
    %v1345 = vpop.f32.mrb[0].mxu0
    %v1346 = vadd.f32 %v570, %v1345
    %v1347 = vpop.f32.mrb[0].mxu0
    %v1348 = vpop.f32.mrb[0].mxu0
    %1349 = vdwg.mxu0
    %1350 = vmatprep.subr.bf16.mxu0 %v978
    %1351 = vmatpush1.bf16.msra.mxu0 %v977
    %1352 = vmatprep.subr.bf16.mxu0 %v986
    %1353 = vmatpush1.bf16.msra.mxu0 %v985
    %1354 = vmatprep.subr.bf16.mxu0 %v994
    %1355 = vmatpush1.bf16.msra.mxu0 %v993
    %1356 = vmatprep.subr.bf16.mxu0 %v1002
    %1357 = vmatpush1.bf16.msra.mxu0 %v1001
    %1358 = vmatprep.subr.bf16.mxu0 %v1010
    %1359 = vmatpush1.bf16.msra.mxu0 %v1009
    %1360 = vmatprep.subr.bf16.mxu0 %v1018
    %1361 = vmatpush1.bf16.msra.mxu0 %v1017
    %1362 = vmatprep.subr.bf16.mxu0 %v1026
    %1363 = vmatpush1.bf16.msra.mxu0 %v1025
    %1364 = vmatprep.subr.bf16.mxu0 %v1034
    %1365 = vmatpush1.bf16.msra.mxu0 %v1033
    %1366 = vmatprep.subr.bf16.mxu0 %v1042
    %1367 = vmatpush1.bf16.msra.mxu0 %v1041
    %1368 = vmatprep.subr.bf16.mxu0 %v1050
    %1369 = vmatpush1.bf16.msra.mxu0 %v1049
    %1370 = vmatprep.subr.bf16.mxu0 %v1058
    %1371 = vmatpush1.bf16.msra.mxu0 %v1057
    %1372 = vmatprep.subr.bf16.mxu0 %v1066
    %1373 = vmatpush1.bf16.msra.mxu0 %v1065
    %1374 = vmatprep.subr.bf16.mxu0 %v1074
    %1375 = vmatpush1.bf16.msra.mxu0 %v1073
    %1376 = vmatprep.subr.bf16.mxu0 %v1082
    %1377 = vmatpush1.bf16.msra.mxu0 %v1081
    %1378 = vmatprep.subr.bf16.mxu0 %v1090
    %1379 = vmatpush1.bf16.msra.mxu0 %v1089
    %1380 = vmatprep.subr.bf16.mxu0 %v1098
    %1381 = vmatpush1.bf16.msra.mxu0 %v1097
    %1382 = vmatprep.mubr.bf16.mxu0 %v545
    %1383 = vmatmul.mubr.bf16.gmra.mrb[0].mxu0 %v544
    %v1384 = vpop.f32.mrb[0].mxu0
    %v1385 = vadd.f32 %v574, %v1384
    %v1386 = vpop.f32.mrb[0].mxu0
    %v1387 = vadd.f32 %v578, %v1386
    %v1388 = vpop.f32.mrb[0].mxu0
    %v1389 = vpop.f32.mrb[0].mxu0
    %1390 = vdwg.mxu0
    %v1391 = vmax.f32 %v1262, 0.0
    %v1392 = vmax.f32 %v1264, 0.0
    %v1393 = vmax.f32 %v1303, 0.0
    %v1394 = vmax.f32 %v1305, 0.0
    %v1395 = vmax.f32 %v1344, 0.0
    %v1396 = vmax.f32 %v1346, 0.0
    %v1397 = vmax.f32 %v1385, 0.0
    %v1398 = vmax.f32 %v1387, 0.0
    %v1407 = vcombine.low %v1391, %v1392
    %v1408 = vcombine.low %v1393, %v1394
    %v1410 = vunpack.c.l.s4 1983009808
    %v1411 = vunpack.c.0.s8 %v1410
    %v1412 = vlaneseq
    %v1413 = vshrl.u32 %v1412, 7
    %v1414 = vsub.s32 %v1411, %v1413
    %v1415 = vrot.slane %v1407, %v1414
    %v1417 = vunpack.c.l.s4 1983009808
    %v1418 = vunpack.c.0.s8 %v1417
    %v1419 = vlaneseq
    %v1420 = vshrl.u32 %v1419, 7
    %v1421 = vsub.s32 %v1418, %v1420
    %v1422 = vrot.slane %v1408, %v1421
    %v1423 = vcombine.low %v1415, %v1422
    %v1424 = vcombine.low %v1395, %v1396
    %v1425 = vcombine.low %v1397, %v1398
    %v1427 = vunpack.c.l.s4 1983009808
    %v1428 = vunpack.c.0.s8 %v1427
    %v1429 = vlaneseq
    %v1430 = vshrl.u32 %v1429, 7
    %v1431 = vsub.s32 %v1428, %v1430
    %v1432 = vrot.slane %v1424, %v1431
    %v1434 = vunpack.c.l.s4 1983009808
    %v1435 = vunpack.c.0.s8 %v1434
    %v1436 = vlaneseq
    %v1437 = vshrl.u32 %v1436, 7
    %v1438 = vsub.s32 %v1435, %v1437
    %v1439 = vrot.slane %v1425, %v1438
    %v1440 = vcombine.low %v1432, %v1439
    %1443 = vst [vmem:[#allocation10] sm:$0xff] %v1423
    %1444 = vst [vmem:[#allocation10 + $0x8] sm:$0xff] %v1440
    // Predicated region
    $region46: #{tpu_custom_call.1} parent=1 // pred_check
      _
    $region47: #{tpu_custom_call.1} parent=1 // pred_check_branch
      %1446 = sbr.rel (0) target = $region49
    $region48: #{tpu_custom_call.1} parent=1 // pred_region
      %s1448 = ssub.s32 256, 256
      %1449 = vsyncadd [#allocation4], %s1448
      %s1451 = sshll.u32 [#allocation10], 4
      %s1452 = int_to_ptr.vmem [resolvable:$true] %s1451
      %1454 = dma.vmem_to_hbm [thread:$0]  %s1452, 256, %s7, [#allocation4]
    $region49: #{tpu_custom_call.1} parent=1 // pred_fallthru
      _
    // Predicated region
    $region50: #{tpu_custom_call.1} parent=1 // pred_check
      _
    $region51: #{tpu_custom_call.1} parent=1 // pred_check_branch
      %1456 = sbr.rel (0) target = $region53
    $region52: #{tpu_custom_call.1} parent=1 // pred_region
      %1457 = dma.done [#allocation4], 256
    $region53: #{tpu_custom_call.1} parent=1 // pred_fallthru
      _
    %1458 = vsyncpa [#allocation3], 1
    %1459 = vsyncpa [#allocation6], 1
    %1460 = vsyncpa [#allocation9], 1
    %1461 = vsyncpa [#allocation4], 1

</llo_original>
